<compile_context>
chip_gen: v6e
topology: v6e:2x2x1
jax: 0.10.0
libtpu: 0.0.40
codegen_flags: <defaults>
</compile_context>

<pallas_src>
import jax
import jax.numpy as jnp
from jax.experimental import pallas as pl
from jax.experimental.pallas import tpu as pltpu


def _round_up(n, m):
    return ((n + m - 1) // m) * m


def _select_tiling(rows, max_tile_rows):
    """Pick (tile_rows, padded_rows) for the packed-row grid.

    tile_rows is a multiple of 8 (sublane rule); the grid-step count is >= 2 and
    even whenever there is enough work, so v7x megacore splits the batch.
    """
    rows8 = _round_up(max(rows, 8), 8)
    max_tile_rows = _round_up(max(max_tile_rows, 8), 8)
    if rows8 <= max_tile_rows:
        if rows8 >= 1024:
            # Enough work to feed two TensorCores -> split into 2 tiles.
            tile_rows = _round_up((rows8 + 1) // 2, 8)
        else:
            tile_rows = rows8
    else:
        num = -(-rows8 // max_tile_rows)      # ceil
        num = _round_up(num, 2)               # even grid-step count for v7x megacore
        tile_rows = _round_up(-(-rows8 // num), 8)
    padded_rows = _round_up(rows8, tile_rows)
    return tile_rows, padded_rows


def zdisc_kernel(x_ref, w1_ref, b1_ref, w2_ref, b2_ref, w3_ref, b3_ref, o_ref):
    # x tile: (tile_rows, pack*z) -> bf16 MXU operands (no-op if producer gave bf16).
    x = x_ref[...].astype(jnp.bfloat16)

    # linear1 + leaky_relu(0.2)   (f32 accumulate, f32 activation math)
    h = jnp.dot(x, w1_ref[...], preferred_element_type=jnp.float32) + b1_ref[...]
    h = jnp.maximum(h, 0.2 * h)               # 2 VALU ops

    # linear2 + leaky_relu(0.2)
    h = jnp.dot(h.astype(jnp.bfloat16), w2_ref[...],
                preferred_element_type=jnp.float32) + b2_ref[...]
    h = jnp.maximum(h, 0.2 * h)

    # linear3 + exact sigmoid (exp / divide land on the otherwise-idle EUP)
    h = jnp.dot(h.astype(jnp.bfloat16), w3_ref[...],
                preferred_element_type=jnp.float32) + b3_ref[...]
    o_ref[...] = (1.0 / (1.0 + jnp.exp(-h))).astype(o_ref.dtype)


def init_params(key, z_size, d=32, mean=0.0, std=0.02):
    """Mirrors normal_init(mean, std): normal weights, zero biases.

    Weights are stored transposed vs. PyTorch ((in, out)) and cast ONCE to bf16
    for single-pass MXU matmuls; biases stay f32 (added post-accumulation).
    """
    k1, k2, k3 = jax.random.split(key, 3)
    return {
        "w1": (mean + std * jax.random.normal(k1, (z_size, d), jnp.float32)).astype(jnp.bfloat16),
        "b1": jnp.zeros((1, d), jnp.float32),
        "w2": (mean + std * jax.random.normal(k2, (d, d), jnp.float32)).astype(jnp.bfloat16),
        "b2": jnp.zeros((1, d), jnp.float32),
        "w3": (mean + std * jax.random.normal(k3, (d, 1), jnp.float32)).astype(jnp.bfloat16),
        "b3": jnp.zeros((1, 1), jnp.float32),
    }


def pack_params(params, pack):
    """Expand weights into block-diagonal form so `pack` samples share one row."""
    def bdiag(w):
        w = w.astype(jnp.float32)
        return jnp.kron(jnp.eye(pack, dtype=jnp.float32), w).astype(jnp.bfloat16)
    return {
        "w1": bdiag(params["w1"]), "b1": jnp.tile(params["b1"], (1, pack)),
        "w2": bdiag(params["w2"]), "b2": jnp.tile(params["b2"], (1, pack)),
        "w3": bdiag(params["w3"]), "b3": jnp.tile(params["b3"], (1, pack)),
    }


def z_discriminator_forward(x, params, *, max_tile_rows=4096):
    """x: (B, z_size) float32 or bfloat16. params: output of init_params."""
    B, z_in = x.shape
    d = params["w1"].shape[1]

    # Samples packed per 128-lane row (4 when z_size = d = 32).
    pack = max(1, 128 // max(z_in, d))

    rows = -(-B // pack)                      # ceil(B / pack)
    tile_rows, padded_rows = _select_tiling(rows, max_tile_rows)
    num_tiles = padded_rows // tile_rows

    pad = padded_rows * pack - B
    if pad:
        x = jnp.pad(x, ((0, pad), (0, 0)))    # padded rows sliced off after the call
    xp = x.reshape(padded_rows, pack * z_in)  # free row-major reshape in HBM

    pk = pack_params(params, pack)

    # Explicit VMEM budget (lane-padded, double-buffered) so large tiles compile
    # on v7x's 64 MiB VMEM as well as v5e/v6e.
    lane = 128
    x_item = 2 if xp.dtype == jnp.bfloat16 else 4
    vmem = 2 * tile_rows * max(pack * z_in, lane) * x_item          # x tiles
    vmem += 2 * tile_rows * lane * 4                                # out tiles
    vmem += 2 * 2 * (pk["w1"].size + pk["w2"].size + pk["w3"].size)  # bf16 weights
    vmem += 2 * 3 * 8 * lane * 4                                    # biases (padded)
    vmem_limit = int(min(2 * vmem + (4 << 20), 48 << 20))

    const_map = lambda i: (0, 0)  # weights/biases: same block every step -> VMEM-resident

    out = pl.pallas_call(
        zdisc_kernel,
        out_shape=jax.ShapeDtypeStruct((padded_rows, pack), jnp.float32),
        grid_spec=pltpu.PrefetchScalarGridSpec(
            num_scalar_prefetch=0,
            grid=(num_tiles,),
            in_specs=[
                pl.BlockSpec((tile_rows, pack * z_in), lambda i: (i, 0)),  # x: streamed
                pl.BlockSpec(pk["w1"].shape, const_map),
                pl.BlockSpec(pk["b1"].shape, const_map),
                pl.BlockSpec(pk["w2"].shape, const_map),
                pl.BlockSpec(pk["b2"].shape, const_map),
                pl.BlockSpec(pk["w3"].shape, const_map),
                pl.BlockSpec(pk["b3"].shape, const_map),
            ],
            out_specs=pl.BlockSpec((tile_rows, pack), lambda i: (i, 0)),
        ),
        compiler_params=pltpu.CompilerParams(
            dimension_semantics=("parallel",),   # megacore split of the batch on v7x
            vmem_limit_bytes=vmem_limit,
        ),
    )(xp, pk["w1"], pk["b1"], pk["w2"], pk["b2"], pk["w3"], pk["b3"])

    # (padded_rows, pack) row-major == samples in original order -> free reshape.
    return out.reshape(-1, 1)[:B]


def reference_forward(x, params):
    """Pure-JAX f32 reference (same bf16-rounded weights, f32 math)."""
    w1 = params["w1"].astype(jnp.float32)
    w2 = params["w2"].astype(jnp.float32)
    w3 = params["w3"].astype(jnp.float32)
    h = x @ w1 + params["b1"]
    h = jnp.where(h > 0, h, 0.2 * h)
    h = h @ w2 + params["b2"]
    h = jnp.where(h > 0, h, 0.2 * h)
    h = h @ w3 + params["b3"]
    return jax.nn.sigmoid(h)


if __name__ == "__main__":
    key = jax.random.PRNGKey(0)
    kx, kp, kx2 = jax.random.split(key, 3)

    z_size, d = 32, 32
    params = init_params(kp, z_size, d)

    # Small batch (matches the PyTorch module's typical usage).
    batch = 8
    x = jax.random.normal(kx, (batch, z_size), jnp.float32)
    out = jax.block_until_ready(z_discriminator_forward(x, params))
    ref = reference_forward(x, params)
    assert out.shape == (batch, 1)
    # bf16 matmul operands vs f32 reference -> loosened tolerance.
    assert jnp.allclose(out, ref, atol=1e-2, rtol=1e-2)

    # Larger batch exercising sample packing, multi-tile grid (even step count)
    # and row padding.
    big = 40000
    x_big = jax.random.normal(kx2, (big, z_size), jnp.float32)
    out_big = jax.block_until_ready(z_discriminator_forward(x_big, params))
    ref_big = reference_forward(x_big, params)
    assert out_big.shape == (big, 1)
    assert jnp.allclose(out_big, ref_big, atol=1e-2, rtol=1e-2)

    print("KERNEL_OK")
</pallas_src>

<mosaic_0001>
module attributes {stable_mosaic.version = 11 : i64} {
  func.func @zdisc_kernel(%arg0: i32, %arg1: memref<8x128xf32, #tpu.memory_space<vmem>>, %arg2: memref<128x128xbf16, #tpu.memory_space<vmem>>, %arg3: memref<1x128xf32, #tpu.memory_space<vmem>>, %arg4: memref<128x128xbf16, #tpu.memory_space<vmem>>, %arg5: memref<1x128xf32, #tpu.memory_space<vmem>>, %arg6: memref<128x4xbf16, #tpu.memory_space<vmem>>, %arg7: memref<1x4xf32, #tpu.memory_space<vmem>>, %arg8: memref<8x4xf32, #tpu.memory_space<vmem>>) attributes {dimension_semantics = [#tpu.dimension_semantics<parallel>], iteration_bounds = array<i64: 1>, scalar_prefetch = 0 : i64, scratch_operands = 0 : i64, tpu.core_type = #tpu.core_type<tc>, window_params = [{transform_indices = @transform_0, window_bounds = array<i64: 8, 128>}, {pipeline_mode = #tpu.pipeline_mode<synchronous>, transform_indices = @transform_1, window_bounds = array<i64: 128, 128>}, {pipeline_mode = #tpu.pipeline_mode<synchronous>, transform_indices = @transform_2, window_bounds = array<i64: 1, 128>}, {pipeline_mode = #tpu.pipeline_mode<synchronous>, transform_indices = @transform_3, window_bounds = array<i64: 128, 128>}, {pipeline_mode = #tpu.pipeline_mode<synchronous>, transform_indices = @transform_4, window_bounds = array<i64: 1, 128>}, {pipeline_mode = #tpu.pipeline_mode<synchronous>, transform_indices = @transform_5, window_bounds = array<i64: 128, 4>}, {pipeline_mode = #tpu.pipeline_mode<synchronous>, transform_indices = @transform_6, window_bounds = array<i64: 1, 4>}, {transform_indices = @transform_7, window_bounds = array<i64: 8, 4>}]} {
    %c0 = arith.constant 0 : index
    %c0_0 = arith.constant 0 : index
    %0 = vector.load %arg1[%c0, %c0_0] : memref<8x128xf32, #tpu.memory_space<vmem>>, vector<8x128xf32>
    %1 = arith.truncf %0 : vector<8x128xf32> to vector<8x128xbf16>
    %c0_1 = arith.constant 0 : index
    %c0_2 = arith.constant 0 : index
    %2 = vector.load %arg2[%c0_1, %c0_2] : memref<128x128xbf16, #tpu.memory_space<vmem>>, vector<128x128xbf16>
    %cst = arith.constant dense<0.000000e+00> : vector<8x128xf32>
    %3 = tpu.matmul %1, %2, %cst {dimension_numbers = #tpu.dot_dimension_numbers<[1], [0], [0], [1], [0, 0, 1, 1], [], []>} : vector<8x128xbf16>, vector<128x128xbf16>, vector<8x128xf32> -> vector<8x128xf32>
    %c0_3 = arith.constant 0 : index
    %c0_4 = arith.constant 0 : index
    %4 = vector.load %arg3[%c0_3, %c0_4] : memref<1x128xf32, #tpu.memory_space<vmem>>, vector<1x128xf32>
    %5 = vector.broadcast %4 : vector<1x128xf32> to vector<8x128xf32>
    %6 = arith.addf %3, %5 : vector<8x128xf32>
    %cst_5 = arith.constant 2.000000e-01 : f32
    %7 = vector.broadcast %cst_5 : f32 to vector<8x128xf32>
    %8 = arith.mulf %7, %6 : vector<8x128xf32>
    %9 = arith.maximumf %6, %8 : vector<8x128xf32>
    %10 = arith.truncf %9 : vector<8x128xf32> to vector<8x128xbf16>
    %c0_6 = arith.constant 0 : index
    %c0_7 = arith.constant 0 : index
    %11 = vector.load %arg4[%c0_6, %c0_7] : memref<128x128xbf16, #tpu.memory_space<vmem>>, vector<128x128xbf16>
    %cst_8 = arith.constant dense<0.000000e+00> : vector<8x128xf32>
    %12 = tpu.matmul %10, %11, %cst_8 {dimension_numbers = #tpu.dot_dimension_numbers<[1], [0], [0], [1], [0, 0, 1, 1], [], []>} : vector<8x128xbf16>, vector<128x128xbf16>, vector<8x128xf32> -> vector<8x128xf32>
    %c0_9 = arith.constant 0 : index
    %c0_10 = arith.constant 0 : index
    %13 = vector.load %arg5[%c0_9, %c0_10] : memref<1x128xf32, #tpu.memory_space<vmem>>, vector<1x128xf32>
    %14 = vector.broadcast %13 : vector<1x128xf32> to vector<8x128xf32>
    %15 = arith.addf %12, %14 : vector<8x128xf32>
    %cst_11 = arith.constant 2.000000e-01 : f32
    %16 = vector.broadcast %cst_11 : f32 to vector<8x128xf32>
    %17 = arith.mulf %16, %15 : vector<8x128xf32>
    %18 = arith.maximumf %15, %17 : vector<8x128xf32>
    %19 = arith.truncf %18 : vector<8x128xf32> to vector<8x128xbf16>
    %c0_12 = arith.constant 0 : index
    %c0_13 = arith.constant 0 : index
    %20 = vector.load %arg6[%c0_12, %c0_13] : memref<128x4xbf16, #tpu.memory_space<vmem>>, vector<128x4xbf16>
    %cst_14 = arith.constant dense<0.000000e+00> : vector<8x4xf32>
    %21 = tpu.matmul %19, %20, %cst_14 {dimension_numbers = #tpu.dot_dimension_numbers<[1], [0], [0], [1], [0, 0, 1, 1], [], []>} : vector<8x128xbf16>, vector<128x4xbf16>, vector<8x4xf32> -> vector<8x4xf32>
    %c0_15 = arith.constant 0 : index
    %c0_16 = arith.constant 0 : index
    %22 = vector.load %arg7[%c0_15, %c0_16] : memref<1x4xf32, #tpu.memory_space<vmem>>, vector<1x4xf32>
    %23 = vector.broadcast %22 : vector<1x4xf32> to vector<8x4xf32>
    %24 = arith.addf %21, %23 : vector<8x4xf32>
    %cst_17 = arith.constant 0.000000e+00 : f32
    %25 = vector.broadcast %cst_17 : f32 to vector<8x4xf32>
    %26 = arith.subf %25, %24 : vector<8x4xf32>
    %27 = math.exp %26 : vector<8x4xf32>
    %cst_18 = arith.constant 1.000000e+00 : f32
    %28 = vector.broadcast %cst_18 : f32 to vector<8x4xf32>
    %29 = arith.addf %28, %27 : vector<8x4xf32>
    %cst_19 = arith.constant 1.000000e+00 : f32
    %30 = vector.broadcast %cst_19 : f32 to vector<8x4xf32>
    %31 = arith.divf %30, %29 : vector<8x4xf32>
    %c0_20 = arith.constant 0 : index
    %c0_21 = arith.constant 0 : index
    %32 = vector.load %arg8[%c0_20, %c0_21] : memref<8x4xf32, #tpu.memory_space<vmem>>, vector<8x4xf32>
    tpu.vector_store %arg8[%c0_20, %c0_21], %31 {strides = array<i32>} : memref<8x4xf32, #tpu.memory_space<vmem>>, vector<8x4xf32>,
    return
  }
  func.func @transform_0(%arg0: i32) -> (i32, i32) {
    %c0_i32 = arith.constant 0 : i32
    %c0_i32_0 = arith.constant 0 : i32
    return %arg0, %c0_i32 : i32, i32
  }
  func.func @transform_1(%arg0: i32) -> (i32, i32) {
    %c0_i32 = arith.constant 0 : i32
    %c0_i32_0 = arith.constant 0 : i32
    %c0_i32_1 = arith.constant 0 : i32
    return %c0_i32, %c0_i32_0 : i32, i32
  }
  func.func @transform_2(%arg0: i32) -> (i32, i32) {
    %c0_i32 = arith.constant 0 : i32
    %c0_i32_0 = arith.constant 0 : i32
    %c0_i32_1 = arith.constant 0 : i32
    return %c0_i32, %c0_i32_0 : i32, i32
  }
  func.func @transform_3(%arg0: i32) -> (i32, i32) {
    %c0_i32 = arith.constant 0 : i32
    %c0_i32_0 = arith.constant 0 : i32
    %c0_i32_1 = arith.constant 0 : i32
    return %c0_i32, %c0_i32_0 : i32, i32
  }
  func.func @transform_4(%arg0: i32) -> (i32, i32) {
    %c0_i32 = arith.constant 0 : i32
    %c0_i32_0 = arith.constant 0 : i32
    %c0_i32_1 = arith.constant 0 : i32
    return %c0_i32, %c0_i32_0 : i32, i32
  }
  func.func @transform_5(%arg0: i32) -> (i32, i32) {
    %c0_i32 = arith.constant 0 : i32
    %c0_i32_0 = arith.constant 0 : i32
    %c0_i32_1 = arith.constant 0 : i32
    return %c0_i32, %c0_i32_0 : i32, i32
  }
  func.func @transform_6(%arg0: i32) -> (i32, i32) {
    %c0_i32 = arith.constant 0 : i32
    %c0_i32_0 = arith.constant 0 : i32
    %c0_i32_1 = arith.constant 0 : i32
    return %c0_i32, %c0_i32_0 : i32, i32
  }
  func.func @transform_7(%arg0: i32) -> (i32, i32) {
    %c0_i32 = arith.constant 0 : i32
    %c0_i32_0 = arith.constant 0 : i32
    return %arg0, %c0_i32 : i32, i32
  }
}

</mosaic_0001>

<llo_original>
// kernel: tpu_custom_call.1
$region0: #{tpu_custom_call.1}
  #allocation0 [shape = 'u32[]', space=smem, size = 0x4, offset = 0x4, fixed_abs, tag = 'smem constant byte address 0x4 - core index']
  #allocation1 [shape = 'u32[144,128]{1,0:T(1,128)}', space=vmem, size = 0x12000, scoped, tag = 'internal scratch']
  %s0 = inlined_call_operand.hbm [shape: f32[8,128], index: 0, kind: input, shape index: {}]
  %s1 = inlined_call_operand.vmem [shape: bf16[128,128], index: 1, kind: input, shape index: {}]
  %s2 = inlined_call_operand.vmem [shape: f32[1,128], index: 2, kind: input, shape index: {}]
  %s3 = inlined_call_operand.hbm [shape: bf16[128,128], index: 3, kind: input, shape index: {}]
  %s4 = inlined_call_operand.vmem [shape: f32[1,128], index: 4, kind: input, shape index: {}]
  %s5 = inlined_call_operand.vmem [shape: bf16[128,4], index: 5, kind: input, shape index: {}]
  %s6 = inlined_call_operand.vmem [shape: f32[1,4], index: 6, kind: input, shape index: {}]
  %s7 = inlined_call_operand.vmem [shape: f32[8,4], index: 7, kind: output, shape index: {}]
  %s8 = sld [smem:[#allocation0]]
  $region46: #{tpu_custom_call.1} parent=0
    _
  %s10 = ssub.s32 1, %s8
  %s11 = scalar_select 0, %s10, %s8
  $region1: #{tpu_custom_call.1} parent=0
    #allocation2 [shape = 'u8[4096]{0}', space=vmem, size = 0x1000, scoped, tag = 'input window, operand 0, single buffered']
    #allocation3 [shape = 's32[1]{0}', space=sflag, size = 0x4, scoped, tag = 'scoped memory for tpu_custom_call.1']
    #allocation4 [shape = 'u8[32768]{0}', space=vmem, size = 0x8000, scoped, tag = 'input window, operand 3, single buffered']
    #allocation5 [shape = 's32[1]{0}', space=sflag, size = 0x4, scoped, tag = 'scoped memory for tpu_custom_call.1']
    %12 = vsyncpa [#allocation3], 0
    %13 = vsyncpa [#allocation5], 0
    // Predicated region
    $region2: #{tpu_custom_call.1} parent=1 // pred_check
      _
    $region3: #{tpu_custom_call.1} parent=1 // pred_check_branch
      %15 = sbr.rel (0) target = $region5
    $region4: #{tpu_custom_call.1} parent=1 // pred_region
      %s17 = ssub.s32 128, 128
      %18 = vsyncadd [#allocation3], %s17
      %s20 = sshll.u32 [#allocation2], 4
      %s21 = int_to_ptr.vmem [resolvable:$true] %s20
      %23 = dma.hbm_to_vmem [thread:$0]  %s0, 128, %s21, [#allocation3]
    $region5: #{tpu_custom_call.1} parent=1 // pred_fallthru
      _
    // Predicated region
    $region6: #{tpu_custom_call.1} parent=1 // pred_check
      _
    $region7: #{tpu_custom_call.1} parent=1 // pred_check_branch
      %25 = sbr.rel (0) target = $region9
    $region8: #{tpu_custom_call.1} parent=1 // pred_region
      _
    $region9: #{tpu_custom_call.1} parent=1 // pred_fallthru
      _
    // Predicated region
    $region10: #{tpu_custom_call.1} parent=1 // pred_check
      _
    $region11: #{tpu_custom_call.1} parent=1 // pred_check_branch
      %27 = sbr.rel (0) target = $region13
    $region12: #{tpu_custom_call.1} parent=1 // pred_region
      _
    $region13: #{tpu_custom_call.1} parent=1 // pred_fallthru
      _
    // Predicated region
    $region14: #{tpu_custom_call.1} parent=1 // pred_check
      _
    $region15: #{tpu_custom_call.1} parent=1 // pred_check_branch
      %29 = sbr.rel (0) target = $region17
    $region16: #{tpu_custom_call.1} parent=1 // pred_region
      %s31 = ssub.s32 1024, 1024
      %32 = vsyncadd [#allocation5], %s31
      %s33 = sshll.u32 [#allocation4], 4
      %s34 = int_to_ptr.vmem [resolvable:$true] %s33
      %39 = dma.hbm_to_vmem [thread:$0]  %s3, 1024, %s34, [#allocation5], 64, 64, 4
    $region17: #{tpu_custom_call.1} parent=1 // pred_fallthru
      _
    // Predicated region
    $region18: #{tpu_custom_call.1} parent=1 // pred_check
      _
    $region19: #{tpu_custom_call.1} parent=1 // pred_check_branch
      %41 = sbr.rel (0) target = $region21
    $region20: #{tpu_custom_call.1} parent=1 // pred_region
      _
    $region21: #{tpu_custom_call.1} parent=1 // pred_fallthru
      _
    // Predicated region
    $region22: #{tpu_custom_call.1} parent=1 // pred_check
      _
    $region23: #{tpu_custom_call.1} parent=1 // pred_check_branch
      %43 = sbr.rel (0) target = $region25
    $region24: #{tpu_custom_call.1} parent=1 // pred_region
      _
    $region25: #{tpu_custom_call.1} parent=1 // pred_fallthru
      _
    // Predicated region
    $region26: #{tpu_custom_call.1} parent=1 // pred_check
      _
    $region27: #{tpu_custom_call.1} parent=1 // pred_check_branch
      %45 = sbr.rel (0) target = $region29
    $region28: #{tpu_custom_call.1} parent=1 // pred_region
      _
    $region29: #{tpu_custom_call.1} parent=1 // pred_fallthru
      _
    // Predicated region
    $region30: #{tpu_custom_call.1} parent=1 // pred_check
      _
    $region31: #{tpu_custom_call.1} parent=1 // pred_check_branch
      %47 = sbr.rel (0) target = $region33
    $region32: #{tpu_custom_call.1} parent=1 // pred_region
      %48 = dma.done [#allocation3], 128
    $region33: #{tpu_custom_call.1} parent=1 // pred_fallthru
      _
    // Predicated region
    $region34: #{tpu_custom_call.1} parent=1 // pred_check
      _
    $region35: #{tpu_custom_call.1} parent=1 // pred_check_branch
      %50 = sbr.rel (0) target = $region37
    $region36: #{tpu_custom_call.1} parent=1 // pred_region
      %51 = dma.done [#allocation5], 1024
    $region37: #{tpu_custom_call.1} parent=1 // pred_fallthru
      _
    %v53 = vld [vmem:[#allocation2] sm:$0xff]
    %v54 = vpack.c.bf16 %v53, %v53
    %v55 = vld [vmem:[%s1] sm:$0xf]
    %v56 = vld [vmem:[%s1 + $0x4] sm:$0xf]
    %v57 = vld [vmem:[%s1 + $0x8] sm:$0xf]
    %v58 = vld [vmem:[%s1 + $0xc] sm:$0xf]
    %v59 = vld [vmem:[%s1 + $0x10] sm:$0xf]
    %v60 = vld [vmem:[%s1 + $0x14] sm:$0xf]
    %v61 = vld [vmem:[%s1 + $0x18] sm:$0xf]
    %v62 = vld [vmem:[%s1 + $0x1c] sm:$0xf]
    %v63 = vld [vmem:[%s1 + $0x20] sm:$0xf]
    %v64 = vld [vmem:[%s1 + $0x24] sm:$0xf]
    %v65 = vld [vmem:[%s1 + $0x28] sm:$0xf]
    %v66 = vld [vmem:[%s1 + $0x2c] sm:$0xf]
    %v67 = vld [vmem:[%s1 + $0x30] sm:$0xf]
    %v68 = vld [vmem:[%s1 + $0x34] sm:$0xf]
    %v69 = vld [vmem:[%s1 + $0x38] sm:$0xf]
    %v70 = vld [vmem:[%s1 + $0x3c] sm:$0xf]
    %v71 = vld [vmem:[%s2] sm:$0x1]
    %v73 = vlaneseq
    %v74 = vshrl.u32 %v73, 7
    %v75 = vsub.s32 0, %v74
    %v76 = vrot.slane %v71, %v75
    %v94 = vunpack.c.l.b16 %v55
    %v95 = vunpack.c.l.b16 %v56
    %v96 = vunpack.c.l.b16 %v57
    %v97 = vunpack.c.l.b16 %v58
    %v98 = vunpack.c.l.b16 %v59
    %v99 = vunpack.c.l.b16 %v60
    %v100 = vunpack.c.l.b16 %v61
    %v101 = vunpack.c.l.b16 %v62
    %v102 = vunpack.c.l.b16 %v63
    %v103 = vunpack.c.l.b16 %v64
    %v104 = vunpack.c.l.b16 %v65
    %v105 = vunpack.c.l.b16 %v66
    %v106 = vunpack.c.l.b16 %v67
    %v107 = vunpack.c.l.b16 %v68
    %v108 = vunpack.c.l.b16 %v69
    %v109 = vunpack.c.l.b16 %v70
    %v110 = vpack.c.b16 %v95, %v94
    %v111 = vpack.c.b16 %v97, %v96
    %v112 = vpack.c.b16 %v99, %v98
    %v113 = vpack.c.b16 %v101, %v100
    %v114 = vpack.c.b16 %v103, %v102
    %v115 = vpack.c.b16 %v105, %v104
    %v116 = vpack.c.b16 %v107, %v106
    %v117 = vpack.c.b16 %v109, %v108
    %126 = vmatprep.subr.bf16.mxu0 0
    %127 = vmatpush1.bf16.msra.mxu0 %v117
    %128 = vmatprep.subr.bf16.mxu0 0
    %129 = vmatpush1.bf16.msra.mxu0 %v116
    %130 = vmatprep.subr.bf16.mxu0 0
    %131 = vmatpush1.bf16.msra.mxu0 %v115
    %132 = vmatprep.subr.bf16.mxu0 0
    %133 = vmatpush1.bf16.msra.mxu0 %v114
    %134 = vmatprep.subr.bf16.mxu0 0
    %135 = vmatpush1.bf16.msra.mxu0 %v113
    %136 = vmatprep.subr.bf16.mxu0 0
    %137 = vmatpush1.bf16.msra.mxu0 %v112
    %138 = vmatprep.subr.bf16.mxu0 0
    %139 = vmatpush1.bf16.msra.mxu0 %v111
    %140 = vmatprep.subr.bf16.mxu0 0
    %141 = vmatpush1.bf16.msra.mxu0 %v110
    %142 = vmatprep.subr.bf16.mxu0 0
    %143 = vmatpush2.bf16.msra.mxu0 0
    %144 = vmatprep.subr.bf16.mxu0 0
    %145 = vmatpush2.bf16.msra.mxu0 0
    %146 = vmatprep.subr.bf16.mxu0 0
    %147 = vmatpush2.bf16.msra.mxu0 0
    %148 = vmatprep.subr.bf16.mxu0 0
    %149 = vmatpush2.bf16.msra.mxu0 0
    %150 = vmatprep.subr.bf16.mxu0 0
    %151 = vmatpush2.bf16.msra.mxu0 0
    %152 = vmatprep.subr.bf16.mxu0 0
    %153 = vmatpush2.bf16.msra.mxu0 0
    %154 = vmatprep.subr.bf16.mxu0 0
    %155 = vmatpush2.bf16.msra.mxu0 0
    %156 = vmatprep.subr.bf16.mxu0 0
    %157 = vmatpush2.bf16.msra.mxu0 0
    %158 = vmatprep.mubr.bf16.mxu0 0
    %159 = vmatmul.mubr.bf16.gmra.mxu0 %v54
    %v160 = vpop.f32.mrf.mxu0
    %v161 = vadd.f32 %v76, %v160
    %v162 = vpop.f32.mrf.mxu0
    %v163 = vpop.f32.mrf.mxu0
    %v164 = vpop.f32.mrf.mxu0
    %165 = vdwg.mxu0
    %v166 = vmul.f32 %v161, 0.2
    %v167 = vmax.f32 %v161, %v166
    %v168 = vpack.c.bf16 %v167, %v167
    %v169 = vld [vmem:[#allocation4] sm:$0xf]
    %v170 = vld [vmem:[#allocation4 + $0x4] sm:$0xf]
    %v171 = vld [vmem:[#allocation4 + $0x8] sm:$0xf]
    %v172 = vld [vmem:[#allocation4 + $0xc] sm:$0xf]
    %v173 = vld [vmem:[#allocation4 + $0x10] sm:$0xf]
    %v174 = vld [vmem:[#allocation4 + $0x14] sm:$0xf]
    %v175 = vld [vmem:[#allocation4 + $0x18] sm:$0xf]
    %v176 = vld [vmem:[#allocation4 + $0x1c] sm:$0xf]
    %v177 = vld [vmem:[#allocation4 + $0x20] sm:$0xf]
    %v178 = vld [vmem:[#allocation4 + $0x24] sm:$0xf]
    %v179 = vld [vmem:[#allocation4 + $0x28] sm:$0xf]
    %v180 = vld [vmem:[#allocation4 + $0x2c] sm:$0xf]
    %v181 = vld [vmem:[#allocation4 + $0x30] sm:$0xf]
    %v182 = vld [vmem:[#allocation4 + $0x34] sm:$0xf]
    %v183 = vld [vmem:[#allocation4 + $0x38] sm:$0xf]
    %v184 = vld [vmem:[#allocation4 + $0x3c] sm:$0xf]
    %v185 = vld [vmem:[%s4] sm:$0x1]
    %v187 = vlaneseq
    %v188 = vshrl.u32 %v187, 7
    %v189 = vsub.s32 0, %v188
    %v190 = vrot.slane %v185, %v189
    %v208 = vunpack.c.l.b16 %v169
    %v209 = vunpack.c.l.b16 %v170
    %v210 = vunpack.c.l.b16 %v171
    %v211 = vunpack.c.l.b16 %v172
    %v212 = vunpack.c.l.b16 %v173
    %v213 = vunpack.c.l.b16 %v174
    %v214 = vunpack.c.l.b16 %v175
    %v215 = vunpack.c.l.b16 %v176
    %v216 = vunpack.c.l.b16 %v177
    %v217 = vunpack.c.l.b16 %v178
    %v218 = vunpack.c.l.b16 %v179
    %v219 = vunpack.c.l.b16 %v180
    %v220 = vunpack.c.l.b16 %v181
    %v221 = vunpack.c.l.b16 %v182
    %v222 = vunpack.c.l.b16 %v183
    %v223 = vunpack.c.l.b16 %v184
    %v224 = vpack.c.b16 %v209, %v208
    %v225 = vpack.c.b16 %v211, %v210
    %v226 = vpack.c.b16 %v213, %v212
    %v227 = vpack.c.b16 %v215, %v214
    %v228 = vpack.c.b16 %v217, %v216
    %v229 = vpack.c.b16 %v219, %v218
    %v230 = vpack.c.b16 %v221, %v220
    %v231 = vpack.c.b16 %v223, %v222
    %240 = vmatprep.subr.bf16.mxu0 0
    %241 = vmatpush1.bf16.msra.mxu0 %v231
    %242 = vmatprep.subr.bf16.mxu0 0
    %243 = vmatpush1.bf16.msra.mxu0 %v230
    %244 = vmatprep.subr.bf16.mxu0 0
    %245 = vmatpush1.bf16.msra.mxu0 %v229
    %246 = vmatprep.subr.bf16.mxu0 0
    %247 = vmatpush1.bf16.msra.mxu0 %v228
    %248 = vmatprep.subr.bf16.mxu0 0
    %249 = vmatpush1.bf16.msra.mxu0 %v227
    %250 = vmatprep.subr.bf16.mxu0 0
    %251 = vmatpush1.bf16.msra.mxu0 %v226
    %252 = vmatprep.subr.bf16.mxu0 0
    %253 = vmatpush1.bf16.msra.mxu0 %v225
    %254 = vmatprep.subr.bf16.mxu0 0
    %255 = vmatpush1.bf16.msra.mxu0 %v224
    %256 = vmatprep.subr.bf16.mxu0 0
    %257 = vmatpush2.bf16.msra.mxu0 0
    %258 = vmatprep.subr.bf16.mxu0 0
    %259 = vmatpush2.bf16.msra.mxu0 0
    %260 = vmatprep.subr.bf16.mxu0 0
    %261 = vmatpush2.bf16.msra.mxu0 0
    %262 = vmatprep.subr.bf16.mxu0 0
    %263 = vmatpush2.bf16.msra.mxu0 0
    %264 = vmatprep.subr.bf16.mxu0 0
    %265 = vmatpush2.bf16.msra.mxu0 0
    %266 = vmatprep.subr.bf16.mxu0 0
    %267 = vmatpush2.bf16.msra.mxu0 0
    %268 = vmatprep.subr.bf16.mxu0 0
    %269 = vmatpush2.bf16.msra.mxu0 0
    %270 = vmatprep.subr.bf16.mxu0 0
    %271 = vmatpush2.bf16.msra.mxu0 0
    %272 = vmatprep.mubr.bf16.mxu0 0
    %273 = vmatmul.mubr.bf16.gmra.mxu0 %v168
    %v274 = vpop.f32.mrf.mxu0
    %v275 = vadd.f32 %v190, %v274
    %v276 = vpop.f32.mrf.mxu0
    %v277 = vpop.f32.mrf.mxu0
    %v278 = vpop.f32.mrf.mxu0
    %279 = vdwg.mxu0
    %v280 = vmul.f32 %v275, 0.2
    %v281 = vmax.f32 %v275, %v280
    %v282 = vpack.c.bf16 %v281, %v281
    %v283 = vld [vmem:[%s5] sm:$0xf]
    %v284 = vld [vmem:[%s5 + $0x4] sm:$0xf]
    %v285 = vld [vmem:[%s5 + $0x8] sm:$0xf]
    %v286 = vld [vmem:[%s5 + $0xc] sm:$0xf]
    %v287 = vld [vmem:[%s5 + $0x10] sm:$0xf]
    %v288 = vld [vmem:[%s5 + $0x14] sm:$0xf]
    %v289 = vld [vmem:[%s5 + $0x18] sm:$0xf]
    %v290 = vld [vmem:[%s5 + $0x1c] sm:$0xf]
    %v291 = vld [vmem:[%s5 + $0x20] sm:$0xf]
    %v292 = vld [vmem:[%s5 + $0x24] sm:$0xf]
    %v293 = vld [vmem:[%s5 + $0x28] sm:$0xf]
    %v294 = vld [vmem:[%s5 + $0x2c] sm:$0xf]
    %v295 = vld [vmem:[%s5 + $0x30] sm:$0xf]
    %v296 = vld [vmem:[%s5 + $0x34] sm:$0xf]
    %v297 = vld [vmem:[%s5 + $0x38] sm:$0xf]
    %v298 = vld [vmem:[%s5 + $0x3c] sm:$0xf]
    %v299 = vld [vmem:[%s6] sm:$0x1]
    %v301 = vlaneseq
    %v302 = vshrl.u32 %v301, 7
    %v303 = vsub.s32 0, %v302
    %v304 = vrot.slane %v299, %v303
    %v322 = vunpack.c.l.b16 %v283
    %v323 = vunpack.c.l.b16 %v284
    %v324 = vunpack.c.l.b16 %v285
    %v325 = vunpack.c.l.b16 %v286
    %v326 = vunpack.c.l.b16 %v287
    %v327 = vunpack.c.l.b16 %v288
    %v328 = vunpack.c.l.b16 %v289
    %v329 = vunpack.c.l.b16 %v290
    %v330 = vunpack.c.l.b16 %v291
    %v331 = vunpack.c.l.b16 %v292
    %v332 = vunpack.c.l.b16 %v293
    %v333 = vunpack.c.l.b16 %v294
    %v334 = vunpack.c.l.b16 %v295
    %v335 = vunpack.c.l.b16 %v296
    %v336 = vunpack.c.l.b16 %v297
    %v337 = vunpack.c.l.b16 %v298
    %v338 = vpack.c.b16 %v323, %v322
    %v339 = vpack.c.b16 %v325, %v324
    %v340 = vpack.c.b16 %v327, %v326
    %v341 = vpack.c.b16 %v329, %v328
    %v342 = vpack.c.b16 %v331, %v330
    %v343 = vpack.c.b16 %v333, %v332
    %v344 = vpack.c.b16 %v335, %v334
    %v345 = vpack.c.b16 %v337, %v336
    %354 = vmatprep.subr.bf16.mxu0 0
    %355 = vmatpush1.bf16.msra.mxu0 %v345
    %356 = vmatprep.subr.bf16.mxu0 0
    %357 = vmatpush1.bf16.msra.mxu0 %v344
    %358 = vmatprep.subr.bf16.mxu0 0
    %359 = vmatpush1.bf16.msra.mxu0 %v343
    %360 = vmatprep.subr.bf16.mxu0 0
    %361 = vmatpush1.bf16.msra.mxu0 %v342
    %362 = vmatprep.subr.bf16.mxu0 0
    %363 = vmatpush1.bf16.msra.mxu0 %v341
    %364 = vmatprep.subr.bf16.mxu0 0
    %365 = vmatpush1.bf16.msra.mxu0 %v340
    %366 = vmatprep.subr.bf16.mxu0 0
    %367 = vmatpush1.bf16.msra.mxu0 %v339
    %368 = vmatprep.subr.bf16.mxu0 0
    %369 = vmatpush1.bf16.msra.mxu0 %v338
    %370 = vmatprep.subr.bf16.mxu0 0
    %371 = vmatpush2.bf16.msra.mxu0 0
    %372 = vmatprep.subr.bf16.mxu0 0
    %373 = vmatpush2.bf16.msra.mxu0 0
    %374 = vmatprep.subr.bf16.mxu0 0
    %375 = vmatpush2.bf16.msra.mxu0 0
    %376 = vmatprep.subr.bf16.mxu0 0
    %377 = vmatpush2.bf16.msra.mxu0 0
    %378 = vmatprep.subr.bf16.mxu0 0
    %379 = vmatpush2.bf16.msra.mxu0 0
    %380 = vmatprep.subr.bf16.mxu0 0
    %381 = vmatpush2.bf16.msra.mxu0 0
    %382 = vmatprep.subr.bf16.mxu0 0
    %383 = vmatpush2.bf16.msra.mxu0 0
    %384 = vmatprep.subr.bf16.mxu0 0
    %385 = vmatpush2.bf16.msra.mxu0 0
    %386 = vmatprep.mubr.bf16.mxu0 0
    %387 = vmatmul.mubr.bf16.gmra.mxu0 %v282
    %v388 = vpop.f32.mrf.mxu0
    %v389 = vadd.f32 %v304, %v388
    %v390 = vpop.f32.mrf.mxu0
    %v391 = vpop.f32.mrf.mxu0
    %v392 = vpop.f32.mrf.mxu0
    %393 = vdwg.mxu0
    %v394 = vsub.f32 0.0, %v389
    %v395 = vmul.f32 %v394, 1.442695
    %v396 = vpow.pop %v395
    %v397 = vadd.f32 %v396, 1.0
    %v398 = vrcp.pop %v397
    %v399 = vmul.f32 1.0, %v398
    %vm400 = vcmask 31744
    %401 = vst.msk [vmem:[%s7] sm:$0xff] %vm400, %v399
    // Predicated region
    $region38: #{tpu_custom_call.1} parent=1 // pred_check
      _
    $region39: #{tpu_custom_call.1} parent=1 // pred_check_branch
      %403 = sbr.rel (0) target = $region41
    $region40: #{tpu_custom_call.1} parent=1 // pred_region
      _
    $region41: #{tpu_custom_call.1} parent=1 // pred_fallthru
      _
    // Predicated region
    $region42: #{tpu_custom_call.1} parent=1 // pred_check
      _
    $region43: #{tpu_custom_call.1} parent=1 // pred_check_branch
      %405 = sbr.rel (0) target = $region45
    $region44: #{tpu_custom_call.1} parent=1 // pred_region
      _
    $region45: #{tpu_custom_call.1} parent=1 // pred_fallthru
      _
    %406 = vsyncpa [#allocation3], 1
    %407 = vsyncpa [#allocation5], 1

</llo_original>
